<compile_context>
chip_gen: v5e
topology: v5e:2x2
jax: 0.10.0
libtpu: 0.0.40
codegen_flags: <defaults>
</compile_context>

<pallas_src>
import math

import jax
import jax.numpy as jnp
from jax import lax
from jax.experimental import pallas as pl
from jax.experimental.pallas import tpu as pltpu


def _round_up(x, m):
    return ((x + m - 1) // m) * m


# -----------------------------------------------------------------------------
# One-time host-side parameter prep (hoisted out of the per-call path).
# -----------------------------------------------------------------------------
def make_positional_encoding(max_len, d_model):
    position = jnp.arange(0, max_len, dtype=jnp.float32)[:, None]             # (L, 1)
    div_term = jnp.exp(jnp.arange(0, d_model, 2, dtype=jnp.float32)
                       * -(math.log(10000.0) / d_model))                      # (D/2,)
    pe = jnp.zeros((max_len, d_model), dtype=jnp.float32)
    pe = pe.at[:, 0::2].set(jnp.sin(position * div_term))
    pe = pe.at[:, 1::2].set(jnp.cos(position * div_term))
    return pe                                                                  # (L, D)


def prepare_embedder_params(weight, bias, pe):
    """Build the fused lookup table ONCE (call at init, not per forward).

    Table row layout:
      [0, V)        : W^T                 (embedding rows)
      row V         : zeros               (target row for out-of-range ids)
      [Vz, Vz + L)  : pe + bias           (positional rows, linear bias folded in)
    """
    D, V = weight.shape
    L = pe.shape[0]
    Vz = _round_up(V + 1, 8)
    Lp = _round_up(L, 8)
    table = jnp.zeros((Vz + Lp, D), jnp.float32)
    table = table.at[:V, :].set(weight.astype(jnp.float32).T)
    table = table.at[Vz:Vz + L, :].set(
        pe.astype(jnp.float32) + bias.astype(jnp.float32)[None, :])
    return dict(table=table, vocab_size=V, pe_base=Vz, max_len=L, d_model=D)


# -----------------------------------------------------------------------------
# Path A: VMEM-resident fused table, two-hot MXU gather (small vocab/d_model).
# -----------------------------------------------------------------------------
def _resident_kernel(TM, VA, S, pe_base):
    def kernel(tok_ref, tab_ref, out_ref):
        i = pl.program_id(0)
        ids = tok_ref[...]                                            # (TM, 1) int32
        row = lax.broadcasted_iota(jnp.int32, (TM, 1), 0) + i * TM    # global row idx
        pos = pe_base + row % S                                       # PE row per token
        col = lax.broadcasted_iota(jnp.int32, (TM, VA), 1)
        # "two-hot": 1.0 at the embedding row and at the (pe+bias) row.
        hot = ((col == ids) | (col == pos)).astype(jnp.float32)       # (TM, VA)
        # MXU does the gather + the add in one shot; table is VMEM-resident.
        out_ref[...] = jnp.dot(hot, tab_ref[...],
                               preferred_element_type=jnp.float32)
    return kernel


def _pick_tm_resident(N, VA, D, table_bytes):
    """Largest tile (<=512 rows) whose working set stays well under 32 MiB scoped VMEM."""
    budget = 16 * 1024 * 1024
    tm = min(512, _round_up(N, 8))
    while tm > 8:
        # table + two-hot temp + double-buffered ids/out (heuristic, f32 words).
        need = table_bytes + tm * (4 * VA + 3 * D + 256) * 4
        if need <= budget:
            break
        tm = max(8, _round_up(tm // 2, 8))
    return max(tm, 8)


# -----------------------------------------------------------------------------
# Path B: table stays in HBM; per-row DMA gather, double-buffered across tiles.
# -----------------------------------------------------------------------------
_GATHER_TM = 32   # rows per tile; 2*TM row DMAs in flight per slot


def _gather_kernel(TM, S, pe_base):
    def kernel(tok_ref, tab_hbm, out_ref, emb_buf, pe_buf, sems):
        # tok_ref : SMEM (N_pad,) int32   scalar-prefetched token ids
        # tab_hbm : HBM  (VA, D) f32      fused table (embeddings + pe rows)
        # emb_buf / pe_buf : VMEM (2*TM, D) f32, two slots for double buffering
        # sems    : DMA semaphores (2, TM, 2) -- one per in-flight row copy
        i = pl.program_id(0)
        n = pl.num_programs(0)
        slot = i % 2

        def issue(tile, slot_idx):
            base = tile * TM
            off = slot_idx * TM
            for t in range(TM):
                tok = tok_ref[base + t]
                pos = pe_base + (base + t) % S
                pltpu.make_async_copy(tab_hbm.at[pl.ds(tok, 1), :],
                                      emb_buf.at[pl.ds(off + t, 1), :],
                                      sems.at[slot_idx, t, 0]).start()
                pltpu.make_async_copy(tab_hbm.at[pl.ds(pos, 1), :],
                                      pe_buf.at[pl.ds(off + t, 1), :],
                                      sems.at[slot_idx, t, 1]).start()

        @pl.when(i == 0)
        def _():
            issue(0, 0)                       # prime slot 0

        @pl.when(i + 1 < n)
        def _():
            issue(i + 1, 1 - slot)            # prefetch next tile before waiting

        # Wait for the current tile's row copies (descriptors rebuilt, same shape/sem).
        off = pl.multiple_of(slot * TM, TM)
        for t in range(TM):
            pltpu.make_async_copy(tab_hbm.at[pl.ds(0, 1), :],
                                  emb_buf.at[pl.ds(off + t, 1), :],
                                  sems.at[slot, t, 0]).wait()
            pltpu.make_async_copy(tab_hbm.at[pl.ds(0, 1), :],
                                  pe_buf.at[pl.ds(off + t, 1), :],
                                  sems.at[slot, t, 1]).wait()

        out_ref[...] = emb_buf[pl.ds(off, TM), :] + pe_buf[pl.ds(off, TM), :]
    return kernel


# -----------------------------------------------------------------------------
# Forward wrapper.
# -----------------------------------------------------------------------------
_RESIDENT_TABLE_LIMIT = 4 * 1024 * 1024   # bytes; below this the table lives in VMEM
_VMEM_LIMIT = 32 * 1024 * 1024            # fits scoped VMEM on v5e/v6e/v7x


def embedder_forward(tokens, params, *, force_gather=False):
    """tokens: (B, S) int -> (B, S, D) f32, matching Embedder.forward (eval mode)."""
    B, S = tokens.shape
    table = params["table"]
    V = params["vocab_size"]
    pe_base = params["pe_base"]
    L = params["max_len"]
    D = params["d_model"]
    VA = table.shape[0]
    assert S <= L, "sequence length exceeds positional-encoding table"

    N = B * S
    tok = tokens.reshape(N).astype(jnp.int32)
    tok = jnp.where((tok >= 0) & (tok < V), tok, V)   # OOB ids -> zero row

    table_bytes = VA * D * 4
    use_resident = (table_bytes <= _RESIDENT_TABLE_LIMIT) and (not force_gather)

    TM = _pick_tm_resident(N, VA, D, table_bytes) if use_resident else _GATHER_TM
    N_pad = _round_up(N, TM)
    if N_pad > N:
        tok = jnp.concatenate([tok, jnp.full((N_pad - N,), V, jnp.int32)])
    n_tiles = N_pad // TM

    if use_resident:
        out_flat = pl.pallas_call(
            _resident_kernel(TM, VA, S, pe_base),
            out_shape=jax.ShapeDtypeStruct((N_pad, D), jnp.float32),
            grid=(n_tiles,),
            in_specs=[
                pl.BlockSpec((TM, 1), lambda i: (i, 0)),     # token ids
                pl.BlockSpec((VA, D), lambda i: (0, 0)),     # table, VMEM-resident
            ],
            out_specs=pl.BlockSpec((TM, D), lambda i: (i, 0)),
            compiler_params=pltpu.CompilerParams(
                dimension_semantics=("parallel",),
                vmem_limit_bytes=_VMEM_LIMIT),
            cost_estimate=pl.CostEstimate(
                flops=int(2 * N_pad * VA * D), transcendentals=0,
                bytes_accessed=int(N_pad * 4 + table_bytes + N_pad * D * 4)),
        )(tok.reshape(N_pad, 1), table)
    else:
        out_flat = pl.pallas_call(
            _gather_kernel(TM, S, pe_base),
            out_shape=jax.ShapeDtypeStruct((N_pad, D), jnp.float32),
            grid_spec=pltpu.PrefetchScalarGridSpec(
                num_scalar_prefetch=1,                        # token ids -> SMEM
                grid=(n_tiles,),
                in_specs=[pl.BlockSpec(memory_space=pl.ANY)],  # table stays in HBM
                out_specs=pl.BlockSpec((TM, D), lambda i, tok_s: (i, 0)),
                scratch_shapes=[
                    pltpu.VMEM((2 * TM, D), jnp.float32),     # embedding rows (2 slots)
                    pltpu.VMEM((2 * TM, D), jnp.float32),     # pe+bias rows   (2 slots)
                    pltpu.SemaphoreType.DMA((2, TM, 2)),      # per-row-copy DMA sems
                ]),
            compiler_params=pltpu.CompilerParams(
                dimension_semantics=("arbitrary",),           # sequential: cross-tile prefetch
                vmem_limit_bytes=_VMEM_LIMIT),
            cost_estimate=pl.CostEstimate(
                flops=int(N_pad * D), transcendentals=0,
                bytes_accessed=int(N_pad * 4 + 3 * N_pad * D * 4)),
        )(tok, table)

    return out_flat[:N].reshape(B, S, D)


if __name__ == "__main__":
    vocab_size, d_model, max_len = 32, 32, 16
    batch, seq = 2, 8

    key = jax.random.PRNGKey(0)
    k_w, k_b, k_t, k_t2 = jax.random.split(key, 4)

    # PyTorch-Linear-style uniform init, deterministic.
    bound = 1.0 / math.sqrt(vocab_size)
    weight = jax.random.uniform(k_w, (d_model, vocab_size), jnp.float32, -bound, bound)
    bias = jax.random.uniform(k_b, (d_model,), jnp.float32, -bound, bound)
    pe = make_positional_encoding(max_len, d_model)

    # Hoisted one-time prep (review item 1).
    params = prepare_embedder_params(weight, bias, pe)

    def reference(toks):
        onehot = jax.nn.one_hot(toks, vocab_size, dtype=jnp.float32)
        return onehot @ weight.T + bias + pe[:toks.shape[1]][None, :, :]

    # --- Path A: VMEM-resident fused table (default for small tables). ---
    tokens = jax.random.randint(k_t, (batch, seq), 0, vocab_size, dtype=jnp.int32)
    fwd = jax.jit(lambda t: embedder_forward(t, params))
    out = jax.block_until_ready(fwd(tokens))
    assert out.shape == (batch, seq, d_model)
    assert jnp.allclose(out, reference(tokens), atol=1e-5, rtol=1e-5)

    # --- Path B: HBM row gather with cross-tile double buffering (large-table
    #     fallback), forced here on a bigger batch so several grid steps
    #     actually exercise the prefetch pipeline. ---
    tokens_b = jax.random.randint(k_t2, (16, seq), 0, vocab_size, dtype=jnp.int32)
    fwd_b = jax.jit(lambda t: embedder_forward(t, params, force_gather=True))
    out_b = jax.block_until_ready(fwd_b(tokens_b))
    assert out_b.shape == (16, seq, d_model)
    assert jnp.allclose(out_b, reference(tokens_b), atol=1e-5, rtol=1e-5)

    print("KERNEL_OK")
</pallas_src>

<mosaic_0001>
module attributes {stable_mosaic.version = 11 : i64} {
  func.func @kernel(%arg0: i32, %arg1: memref<16x1xi32, #tpu.memory_space<vmem>>, %arg2: memref<56x32xf32, #tpu.memory_space<vmem>>, %arg3: memref<16x32xf32, #tpu.memory_space<vmem>>) attributes {dimension_semantics = [#tpu.dimension_semantics<parallel>], iteration_bounds = array<i64: 1>, scalar_prefetch = 0 : i64, scratch_operands = 0 : i64, tpu.core_type = #tpu.core_type<tc>, window_params = [{transform_indices = @transform_0, window_bounds = array<i64: 16, 1>}, {pipeline_mode = #tpu.pipeline_mode<synchronous>, transform_indices = @transform_1, window_bounds = array<i64: 56, 32>}, {transform_indices = @transform_2, window_bounds = array<i64: 16, 32>}]} {
    %c0 = arith.constant 0 : index
    %c0_0 = arith.constant 0 : index
    %0 = vector.load %arg1[%c0, %c0_0] : memref<16x1xi32, #tpu.memory_space<vmem>>, vector<16x1xi32>
    %1 = tpu.iota {dimensions = array<i32: 0>} : vector<16x1xi32>
    %c16_i32 = arith.constant 16 : i32
    %2 = arith.muli %arg0, %c16_i32 : i32
    %3 = vector.broadcast %2 : i32 to vector<16x1xi32>
    %4 = arith.addi %1, %3 : vector<16x1xi32>
    %c8_i32 = arith.constant 8 : i32
    %c0_i32 = arith.constant 0 : i32
    %5 = arith.cmpi eq, %c8_i32, %c0_i32 : i32
    %c1_i32 = arith.constant 1 : i32
    %6 = arith.select %5, %c1_i32, %c8_i32 : i32
    %7 = vector.broadcast %6 : i32 to vector<16x1xi32>
    %8 = arith.remsi %4, %7 : vector<16x1xi32>
    %c0_i32_1 = arith.constant 0 : i32
    %9 = vector.broadcast %c0_i32_1 : i32 to vector<16x1xi32>
    %10 = arith.cmpi ne, %8, %9 : vector<16x1xi32>
    %c0_i32_2 = arith.constant 0 : i32
    %11 = vector.broadcast %c0_i32_2 : i32 to vector<16x1xi32>
    %12 = arith.cmpi slt, %8, %11 : vector<16x1xi32>
    %c0_i32_3 = arith.constant 0 : i32
    %13 = arith.cmpi slt, %6, %c0_i32_3 : i32
    %14 = vector.broadcast %13 : i1 to vector<16x1xi1>
    %15 = vector.broadcast %14 : vector<16x1xi1> to vector<16x1xi1>
    %16 = arith.xori %12, %15 : vector<16x1xi1>
    %17 = arith.andi %16, %10 : vector<16x1xi1>
    %18 = vector.broadcast %6 : i32 to vector<16x1xi32>
    %19 = arith.addi %8, %18 : vector<16x1xi32>
    %20 = arith.select %17, %19, %8 : vector<16x1xi1>, vector<16x1xi32>
    %c40_i32 = arith.constant 40 : i32
    %21 = vector.broadcast %c40_i32 : i32 to vector<16x1xi32>
    %22 = arith.addi %21, %20 : vector<16x1xi32>
    %23 = tpu.iota {dimensions = array<i32: 1>} : vector<16x56xi32>
    %24 = vector.broadcast %0 : vector<16x1xi32> to vector<16x56xi32>
    %25 = arith.cmpi eq, %23, %24 : vector<16x56xi32>
    %26 = vector.broadcast %22 : vector<16x1xi32> to vector<16x56xi32>
    %27 = arith.cmpi eq, %23, %26 : vector<16x56xi32>
    %28 = arith.ori %25, %27 : vector<16x56xi1>
    %29 = arith.extui %28 : vector<16x56xi1> to vector<16x56xi32>
    %30 = arith.sitofp %29 : vector<16x56xi32> to vector<16x56xf32>
    %c0_4 = arith.constant 0 : index
    %c0_5 = arith.constant 0 : index
    %31 = vector.load %arg2[%c0_4, %c0_5] : memref<56x32xf32, #tpu.memory_space<vmem>>, vector<56x32xf32>
    %cst = arith.constant dense<0.000000e+00> : vector<16x32xf32>
    %32 = tpu.matmul %30, %31, %cst {dimension_numbers = #tpu.dot_dimension_numbers<[1], [0], [0], [1], [0, 0, 1, 1], [], []>} : vector<16x56xf32>, vector<56x32xf32>, vector<16x32xf32> -> vector<16x32xf32>
    %c0_6 = arith.constant 0 : index
    %c0_7 = arith.constant 0 : index
    %33 = vector.load %arg3[%c0_6, %c0_7] : memref<16x32xf32, #tpu.memory_space<vmem>>, vector<16x32xf32>
    tpu.vector_store %arg3[%c0_6, %c0_7], %32 {strides = array<i32>} : memref<16x32xf32, #tpu.memory_space<vmem>>, vector<16x32xf32>,
    return
  }
  func.func @transform_0(%arg0: i32) -> (i32, i32) {
    %c0_i32 = arith.constant 0 : i32
    %c0_i32_0 = arith.constant 0 : i32
    return %arg0, %c0_i32 : i32, i32
  }
  func.func @transform_1(%arg0: i32) -> (i32, i32) {
    %c0_i32 = arith.constant 0 : i32
    %c0_i32_0 = arith.constant 0 : i32
    %c0_i32_1 = arith.constant 0 : i32
    return %c0_i32, %c0_i32_0 : i32, i32
  }
  func.func @transform_2(%arg0: i32) -> (i32, i32) {
    %c0_i32 = arith.constant 0 : i32
    %c0_i32_0 = arith.constant 0 : i32
    return %arg0, %c0_i32 : i32, i32
  }
}

</mosaic_0001>

<llo_original>
// kernel: _lambda_.1
$region0: #{_lambda_.1}
  #allocation0 [shape = 'u32[]', space=smem, size = 0x4, offset = 0x4, fixed_abs, tag = 'smem constant byte address 0x4 - core index']
  #allocation1 [shape = 'u32[72,128]{1,0:T(1,128)}', space=vmem, size = 0x9000, scoped, tag = 'internal scratch']
  %s0 = inlined_call_operand.vmem [shape: s32[16,1], index: 0, kind: input, shape index: {}]
  %s1 = inlined_call_operand.hbm [shape: f32[56,32], index: 1, kind: input, shape index: {}]
  %s2 = inlined_call_operand.hbm [shape: f32[16,32], index: 2, kind: output, shape index: {}]
  %s3 = sld [smem:[#allocation0]]
  $region22: #{_lambda_.1} parent=0
    _
  %s5 = ssub.s32 1, %s3
  %s6 = scalar_select 0, %s5, %s3
  $region1: #{_lambda_.1} parent=0
    #allocation2 [shape = 'u8[28672]{0}', space=vmem, size = 0x7000, scoped, tag = 'input window, operand 1, single buffered']
    #allocation3 [shape = 's32[1]{0}', space=sflag, size = 0x4, scoped, tag = 'scoped memory for _lambda_.1']
    #allocation4 [shape = 's32[1]{0}', space=sflag, size = 0x4, scoped, tag = 'scoped memory for _lambda_.1']
    #allocation5 [shape = 'u8[8192]{0}', space=vmem, size = 0x2000, scoped, tag = 'output window, operand 0, single buffered']
    %7 = vsyncpa [#allocation3], 0
    %8 = vsyncpa [#allocation4], 0
    // Predicated region
    $region2: #{_lambda_.1} parent=1 // pred_check
      _
    $region3: #{_lambda_.1} parent=1 // pred_check_branch
      %10 = sbr.rel (0) target = $region5
    $region4: #{_lambda_.1} parent=1 // pred_region
      _
    $region5: #{_lambda_.1} parent=1 // pred_fallthru
      _
    // Predicated region
    $region6: #{_lambda_.1} parent=1 // pred_check
      _
    $region7: #{_lambda_.1} parent=1 // pred_check_branch
      %12 = sbr.rel (0) target = $region9
    $region8: #{_lambda_.1} parent=1 // pred_region
      %14 = vsyncadd [#allocation3], 0
      %s15 = sshll.u32 %s1, 4
      %s16 = int_to_ptr.hbm [resolvable:$true] %s15
      %s17 = sshll.u32 [#allocation2], 4
      %s18 = int_to_ptr.vmem [resolvable:$true] %s17
      %23 = dma.hbm_to_vmem [thread:$0]  %s16, 896, %s18, [#allocation3], 128, 128, 8
    $region9: #{_lambda_.1} parent=1 // pred_fallthru
      _
    // Predicated region
    $region10: #{_lambda_.1} parent=1 // pred_check
      _
    $region11: #{_lambda_.1} parent=1 // pred_check_branch
      %25 = sbr.rel (0) target = $region13
    $region12: #{_lambda_.1} parent=1 // pred_region
      %27 = dma.done [#allocation3], 896
    $region13: #{_lambda_.1} parent=1 // pred_fallthru
      _
    %v28 = vld [vmem:[%s0] sm:$0xff]
    %v29 = vld [vmem:[%s0 + $0x8] sm:$0xff]
    %v30 = vlaneseq
    %v31 = vshrl.u32 %v30, 7
    %v32 = vadd.s32 %v31, 8
    %s33 = smul.u32 0, 16
    %v34 = vstv %s33
    %v35 = vadd.s32 %v31, %v34
    %v36 = vadd.s32 %v32, %v34
    %vm37 = vcmp.lt.s32.totalorder %v35, 0
    %v38 = vsub.s32 0, %v35
    %v39 = vsel %vm37, %v38, %v35
    %v40 = vshrl.u32 %v39, 3
    %v41 = vand.u32 %v39, 7
    %v42 = vsub.s32 0, %v41
    %v43 = vsel %vm37, %v42, %v41
    %vm44 = vcmp.lt.s32.totalorder %v36, 0
    %v45 = vsub.s32 0, %v36
    %v46 = vsel %vm44, %v45, %v36
    %v47 = vshrl.u32 %v46, 3
    %v48 = vand.u32 %v46, 7
    %v49 = vsub.s32 0, %v48
    %v50 = vsel %vm44, %v49, %v48
    %vm51 = vcmp.ne.s32.totalorder %v43, 0
    %vm52 = vcmp.ne.s32.totalorder %v50, 0
    %vm53 = vcmp.lt.s32.totalorder %v43, 0
    %vm54 = vcmp.lt.s32.totalorder %v50, 0
    %vm55 = vmand %vm53, %vm51
    %vm56 = vmand %vm54, %vm52
    %v57 = vadd.s32 %v43, 8
    %v58 = vadd.s32 %v50, 8
    %v59 = vsel %vm55, %v57, %v43
    %v60 = vsel %vm56, %v58, %v50
    %v61 = vadd.s32 %v59, 40
    %v62 = vadd.s32 %v60, 40
    %v63 = vlaneseq
    %v64 = vand.u32 %v63, 127
    %65 = vset.pattern.permute.xlu0 0
    %66 = vperm.xlu0 %65, %v28
    %v67 = vpop.permute.xlu0 %66
    %68 = vset.pattern.permute.xlu0 0
    %69 = vperm.xlu0 %68, %v29
    %v70 = vpop.permute.xlu0 %69
    %vm71 = vcmp.eq.s32.totalorder %v64, %v67
    %vm72 = vcmp.eq.s32.totalorder %v64, %v70
    %vm73 = vcmp.eq.s32.totalorder %v64, %v61
    %vm74 = vcmp.eq.s32.totalorder %v64, %v62
    %vm75 = vmor %vm71, %vm73
    %vm76 = vmor %vm72, %vm74
    %v77 = vsel %vm75, 1, 0
    %v78 = vsel %vm76, 1, 0
    %v79 = vcvt.s32.f32 %v77
    %v80 = vcvt.s32.f32 %v78
    %v81 = vld [vmem:[#allocation2] sm:$0xff]
    %v82 = vld [vmem:[#allocation2 + $0x8] sm:$0xff]
    %v83 = vld [vmem:[#allocation2 + $0x10] sm:$0xff]
    %v84 = vld [vmem:[#allocation2 + $0x18] sm:$0xff]
    %v85 = vld [vmem:[#allocation2 + $0x20] sm:$0xff]
    %v86 = vld [vmem:[#allocation2 + $0x28] sm:$0xff]
    %v87 = vld [vmem:[#allocation2 + $0x30] sm:$0xff]
    %vm88 = vcmask 457728
    %v90 = vsel %vm88, %v79, 0
    %v93 = vsel %vm88, %v80, 0
    %95 = vmatpush.msra.mxu0 0.0
    %96 = vmatpush.msra.mxu0 0.0
    %97 = vmatpush.msra.mxu0 0.0
    %98 = vmatpush.msra.mxu0 0.0
    %99 = vmatpush.msra.mxu0 0.0
    %100 = vmatpush.msra.mxu0 0.0
    %101 = vmatpush.msra.mxu0 0.0
    %102 = vmatpush.msra.mxu0 0.0
    %103 = vmatpush.msra.mxu0 0.0
    %104 = vmatpush.msra.mxu0 %v87
    %105 = vmatpush.msra.mxu0 %v86
    %106 = vmatpush.msra.mxu0 %v85
    %107 = vmatpush.msra.mxu0 %v84
    %108 = vmatpush.msra.mxu0 %v83
    %109 = vmatpush.msra.mxu0 %v82
    %110 = vmatpush.msra.mxu0 %v81
    %111 = vmatmul.f32.gmra.mxu0 %v90
    %v112 = vpop.f32.mrf.mxu0
    %v113 = vadd.f32 0.0, %v112
    %114 = vmatmul.f32.gmra.mxu0 %v93
    %v115 = vpop.f32.mrf.mxu0
    %v116 = vadd.f32 0.0, %v115
    %117 = vdwg.mxu0
    %vm118 = vcmask 261120
    %119 = vst.msk [vmem:[#allocation5] sm:$0xff] %vm118, %v113
    %120 = vst.msk [vmem:[#allocation5 + $0x8] sm:$0xff] %vm118, %v116
    // Predicated region
    $region14: #{_lambda_.1} parent=1 // pred_check
      _
    $region15: #{_lambda_.1} parent=1 // pred_check_branch
      %122 = sbr.rel (0) target = $region17
    $region16: #{_lambda_.1} parent=1 // pred_region
      %124 = vsyncadd [#allocation4], 0
      %s125 = sshll.u32 [#allocation5], 4
      %s126 = int_to_ptr.vmem [resolvable:$true] %s125
      %s127 = sshll.u32 %s2, 4
      %s128 = int_to_ptr.hbm [resolvable:$true] %s127
      %133 = dma.vmem_to_hbm [thread:$0]  %s126, 256, %s128, [#allocation4], 128, 128, 8
    $region17: #{_lambda_.1} parent=1 // pred_fallthru
      _
    // Predicated region
    $region18: #{_lambda_.1} parent=1 // pred_check
      _
    $region19: #{_lambda_.1} parent=1 // pred_check_branch
      %135 = sbr.rel (0) target = $region21
    $region20: #{_lambda_.1} parent=1 // pred_region
      %137 = dma.done [#allocation4], 256
    $region21: #{_lambda_.1} parent=1 // pred_fallthru
      _
    %138 = vsyncpa [#allocation3], 1
    %139 = vsyncpa [#allocation4], 1

</llo_original>
